<compile_context>
chip_gen: v6e
topology: v6e:2x2x1
jax: 0.10.0
libtpu: 0.0.40
codegen_flags: <defaults>
</compile_context>

<pallas_src>
import jax
import jax.numpy as jnp
from jax import lax
from jax.experimental import pallas as pl
from jax.experimental.pallas import tpu as pltpu

_SUBLANES = 8
_LANES = 128


# ---------------------------------------------------------------------------
# Hardware query (generation-aware dispatch).
# ---------------------------------------------------------------------------
def _vmem_capacity_bytes() -> int:
    try:
        cap = int(pltpu.get_tpu_info().vmem_capacity_bytes)
        if cap > 0:
            return cap
    except Exception:
        pass
    return 64 << 20  # conservative fallback (v7x per-core VMEM)


def _round_up(x: int, m: int) -> int:
    return ((x + m - 1) // m) * m


# ---------------------------------------------------------------------------
# Single-pass kernel: whole PSF resident in VMEM, in-place (aliased) output.
# ---------------------------------------------------------------------------
def _psf_normalize_whole_kernel(psf_ref, out_ref):
    x = psf_ref[...]
    inv = 1.0 / jnp.sum(x)                 # exact scalar reciprocal
    out_ref[...] = (x * inv).astype(out_ref.dtype)


def _normalize_psf_single_pass(psf: jax.Array, out_dtype) -> jax.Array:
    H, W = psf.shape
    cap = _vmem_capacity_bytes()
    in_bytes = H * W * psf.dtype.itemsize
    out_bytes = H * W * out_dtype.itemsize
    vmem_limit = int(min(cap - (4 << 20),
                         max(16 << 20, in_bytes + out_bytes + (2 << 20))))
    # out = in * scalar is trivially in-place safe: alias the output onto the
    # input buffer (only when shape/dtype match) so no second full-size HBM
    # array is allocated.  NOTE: the input array is donated.
    aliases = {0: 0} if out_dtype == psf.dtype else {}
    return pl.pallas_call(
        _psf_normalize_whole_kernel,
        out_shape=jax.ShapeDtypeStruct((H, W), out_dtype),
        in_specs=[pl.BlockSpec(memory_space=pltpu.MemorySpace.VMEM)],
        out_specs=pl.BlockSpec(memory_space=pltpu.MemorySpace.VMEM),
        input_output_aliases=aliases,
        compiler_params=pltpu.CompilerParams(vmem_limit_bytes=vmem_limit),
    )(psf)


# ---------------------------------------------------------------------------
# Tiled fallback: pass 1 = reduce (split over cores), pass 2 = scale.
# ---------------------------------------------------------------------------
def _make_sum_kernel(H, tile_h, tiles_per_split, need_mask):
    def kernel(psf_ref, part_ref, acc_ref):
        c = pl.program_id(0)          # split (megacore-parallel) axis
        t = pl.program_id(1)          # row tiles within this split

        @pl.when(t == 0)
        def _():
            acc_ref[...] = jnp.zeros_like(acc_ref)

        x = psf_ref[...]
        if need_mask:
            # Ragged last tile / phantom tiles of an odd split are not
            # guaranteed to contain zeros -> mask out-of-range rows.
            tile_idx = c * tiles_per_split + t
            row0 = tile_idx * tile_h
            rows = lax.broadcasted_iota(jnp.int32, x.shape, 0)
            x = jnp.where(rows + row0 < H, x, 0.0)

        # Sublane (vector) partial sum per tile into the (1, W) accumulator.
        acc_ref[...] += jnp.sum(x, axis=0, keepdims=True)

        @pl.when(t == pl.num_programs(1) - 1)
        def _():
            # Single cross-lane reduce per split; store the scalar in element
            # [0, 0] of this split's (8, 128) output block (zeros elsewhere),
            # so the consumer can simply sum the partials array.
            s = jnp.sum(acc_ref[...])
            r = lax.broadcasted_iota(jnp.int32, (_SUBLANES, _LANES), 0)
            l = lax.broadcasted_iota(jnp.int32, (_SUBLANES, _LANES), 1)
            part_ref[...] = jnp.where((r == 0) & (l == 0), s, 0.0)

    return kernel


def _psf_scale_kernel(part_ref, psf_ref, out_ref):
    # partials hold exactly one non-zero scalar per split; their sum is the
    # global PSF sum.
    inv = 1.0 / jnp.sum(part_ref[...])
    out_ref[...] = (psf_ref[...] * inv).astype(out_ref.dtype)


def _normalize_psf_tiled(psf: jax.Array, out_dtype, tile_h=None) -> jax.Array:
    H, W = psf.shape
    cap = _vmem_capacity_bytes()
    row_bytes = W * 4

    if tile_h is None:
        # ~2 MiB row tiles (per-step overhead amortized, stays well inside the
        # scoped-VMEM budget even on v5e), never more than the 8-aligned H.
        max_tile_bytes = min(2 << 20, max(256 << 10, cap // 16))
        tile_h = max(8, min(512, (max_tile_bytes // row_bytes) // 8 * 8))
        tile_h = min(tile_h, _round_up(H, 8))
    assert tile_h % 8 == 0, "tile_h must be a multiple of 8"

    n_tiles = pl.cdiv(H, tile_h)
    # Split the reduction into (up to) 2 chunks; the outer "parallel" axis lets
    # megacore parts (v7x) run one chunk per TensorCore.  Harmless on 1-TC.
    num_splits = 2 if n_tiles >= 2 else 1
    tiles_per_split = pl.cdiv(n_tiles, num_splits)
    need_mask = (H % tile_h != 0) or (num_splits * tiles_per_split != n_tiles)

    tile_bytes = tile_h * row_bytes
    # Explicit limit: pass 2 uses ~2 in-bufs + 2 out-bufs of tile_bytes plus
    # the small partials block; v5e's 16 MiB scoped default is too tight to
    # rely on for wide W.
    vmem_limit = int(min(cap - (4 << 20),
                         max(16 << 20, 8 * tile_bytes + row_bytes + (2 << 20))))

    def sum_in_map(c, t):
        # Clamp phantom tiles (odd n_tiles) onto the last real tile; their
        # contribution is fully masked inside the kernel.
        idx = jnp.minimum(c * tiles_per_split + t, n_tiles - 1)
        return (idx, 0)

    # Pass 1: global sum -> (num_splits * 8, 128) partials, one scalar/split.
    partials = pl.pallas_call(
        _make_sum_kernel(H, tile_h, tiles_per_split, need_mask),
        out_shape=jax.ShapeDtypeStruct((num_splits * _SUBLANES, _LANES),
                                       jnp.float32),
        grid_spec=pltpu.PrefetchScalarGridSpec(
            num_scalar_prefetch=0,
            grid=(num_splits, tiles_per_split),
            in_specs=[pl.BlockSpec((tile_h, W), sum_in_map)],
            out_specs=pl.BlockSpec((_SUBLANES, _LANES), lambda c, t: (c, 0)),
            scratch_shapes=[pltpu.VMEM((1, W), jnp.float32)],
        ),
        compiler_params=pltpu.CompilerParams(
            dimension_semantics=("parallel", "arbitrary"),
            vmem_limit_bytes=vmem_limit,
        ),
    )(psf)

    # Pass 2: scale.  No jnp.pad / post-slice: the ragged last output block is
    # masked by Pallas on writeback.  Output aliases the input (in-place scale)
    # when dtypes match, avoiding a second (H, W) HBM allocation.
    aliases = {1: 0} if out_dtype == psf.dtype else {}
    out = pl.pallas_call(
        _psf_scale_kernel,
        out_shape=jax.ShapeDtypeStruct((H, W), out_dtype),
        grid_spec=pltpu.PrefetchScalarGridSpec(
            num_scalar_prefetch=0,
            grid=(n_tiles,),
            in_specs=[
                pl.BlockSpec((num_splits * _SUBLANES, _LANES),
                             lambda i: (0, 0)),          # resident partials
                pl.BlockSpec((tile_h, W), lambda i: (i, 0)),
            ],
            out_specs=pl.BlockSpec((tile_h, W), lambda i: (i, 0)),
        ),
        input_output_aliases=aliases,
        compiler_params=pltpu.CompilerParams(
            dimension_semantics=("parallel",),
            vmem_limit_bytes=vmem_limit,
        ),
    )(partials, psf)
    return out


# ---------------------------------------------------------------------------
# Dispatcher.
# ---------------------------------------------------------------------------
def normalize_psf(psf: jax.Array, *, out_dtype=jnp.float32,
                  single_pass_max_bytes=None, tile_h=None) -> jax.Array:
    """psf / psf.sum() computed in Pallas TPU kernels.

    The input may be donated (output aliases it) when dtypes match.
    A zero-sum PSF yields inf/nan, matching psf / psf.sum() semantics.
    """
    assert psf.ndim == 2, "PSF must be 2-D (H, W)"
    psf = psf.astype(jnp.float32)
    out_dtype = jnp.dtype(out_dtype)
    H, W = psf.shape
    if single_pass_max_bytes is None:
        # ~0.375x of this generation's VMEM: v5e/v6e (128 MiB) keep PSFs up to
        # ~48 MiB on the cheaper 2-pass path; v7x (64 MiB) up to ~24 MiB.
        single_pass_max_bytes = int(0.375 * _vmem_capacity_bytes())
    if H * W * 4 <= single_pass_max_bytes:
        return _normalize_psf_single_pass(psf, out_dtype)
    return _normalize_psf_tiled(psf, out_dtype, tile_h=tile_h)


class LoadPSF:
    """JAX/Pallas equivalent of the PyTorch LoadPSF module.

    Instead of loading from a .npz/.npy/.fits file, the raw PSF array is
    passed in directly.  Optional crop, then normalization to unit sum
    (done in the Pallas kernels).  forward() returns the stored PSF.
    Note: the passed-in array may be donated (in-place normalization).
    """

    def __init__(self, psf_raw: jax.Array, crop=None):
        psf = psf_raw.astype(jnp.float32)
        if crop is not None:
            psf = psf[crop[0]:crop[1], crop[2]:crop[3]]
        self.psf = normalize_psf(psf)
        self.psf_shape = self.psf.shape

    def forward(self):
        return self.psf

    __call__ = forward


if __name__ == "__main__":
    key = jax.random.PRNGKey(0)
    k1, k2, k3 = jax.random.split(key, 3)

    # NOTE: references are computed BEFORE invoking the kernels because the
    # kernels alias (donate) their input buffers.

    # 1) Single-pass (whole-PSF-in-VMEM, aliased in-place) path.
    H, W = 64, 128
    psf_raw = jnp.abs(jax.random.normal(k1, (H, W), dtype=jnp.float32)) + 1e-3
    ref = psf_raw / jnp.sum(psf_raw)
    module = LoadPSF(psf_raw)                      # psf_raw donated here
    out = jax.block_until_ready(module())
    assert out.shape == (H, W) and out.dtype == jnp.float32
    assert jnp.allclose(out, ref, rtol=1e-5, atol=1e-7), "single-pass mismatch"
    assert jnp.allclose(jnp.sum(out), 1.0, rtol=1e-5), "PSF does not sum to 1"

    # 2) Cropped, odd-shaped PSF (no divisibility requirement).
    psf_raw2 = jnp.abs(jax.random.normal(k2, (H, W), dtype=jnp.float32)) + 1e-3
    crop = (2, 50, 3, 103)                          # -> (48, 100)
    psf_c = psf_raw2[crop[0]:crop[1], crop[2]:crop[3]]
    ref_c = psf_c / jnp.sum(psf_c)
    module_c = LoadPSF(psf_raw2, crop=crop)
    out_c = jax.block_until_ready(module_c())
    assert out_c.shape == psf_c.shape
    assert jnp.allclose(out_c, ref_c, rtol=1e-5, atol=1e-7), "cropped mismatch"

    # 3) Force the tiled (reduce + scale) path: tile_h=80 on H=200 gives a
    #    ragged last tile (40 valid rows) and, with 2 splits over 3 tiles, a
    #    fully-masked phantom tile on split 1.
    psf_big = jnp.abs(jax.random.normal(k3, (200, 256), dtype=jnp.float32)) + 1e-3
    ref_t = psf_big / jnp.sum(psf_big)
    out_t = jax.block_until_ready(
        normalize_psf(psf_big, single_pass_max_bytes=0, tile_h=80))
    assert out_t.shape == psf_big.shape
    assert jnp.allclose(out_t, ref_t, rtol=1e-5, atol=1e-7), "tiled mismatch"
    assert jnp.allclose(jnp.sum(out_t), 1.0, rtol=1e-5), "tiled PSF sum != 1"

    # 4) Tiled path with divisible H (odd tile count -> phantom tile only).
    psf_big2 = jnp.abs(jax.random.normal(k1, (192, 256), dtype=jnp.float32)) + 1e-3
    ref_t2 = psf_big2 / jnp.sum(psf_big2)
    out_t2 = jax.block_until_ready(
        normalize_psf(psf_big2, single_pass_max_bytes=0, tile_h=64))
    assert jnp.allclose(out_t2, ref_t2, rtol=1e-5, atol=1e-7), "tiled mismatch (div)"

    print("KERNEL_OK")
</pallas_src>

<mosaic_0001>
module attributes {stable_mosaic.version = 11 : i64} {
  func.func @_psf_normalize_whole_kernel(%arg0: memref<64x128xf32, #tpu.memory_space<vmem>>, %arg1: memref<64x128xf32, #tpu.memory_space<vmem>>) attributes {dimension_semantics = [], scalar_prefetch = 0 : i64, scratch_operands = 0 : i64, tpu.core_type = #tpu.core_type<tc>} {
    %c0 = arith.constant 0 : index
    %c0_0 = arith.constant 0 : index
    %0 = vector.load %arg0[%c0, %c0_0] : memref<64x128xf32, #tpu.memory_space<vmem>>, vector<64x128xf32>
    %1 = vector.shape_cast %0 : vector<64x128xf32> to vector<1x64x128xf32>
    %cst = arith.constant dense<0.000000e+00> : vector<1xf32>
    %2 = vector.multi_reduction <add>, %1, %cst [1, 2] : vector<1x64x128xf32> to vector<1xf32>
    %3 = vector.shape_cast %2 : vector<1xf32> to vector<1x1x1xf32>
    %4 = vector.extract %3[0, 0, 0] : f32 from vector<1x1x1xf32>
    %cst_1 = arith.constant 1.000000e+00 : f32
    %5 = arith.divf %cst_1, %4 : f32
    %6 = vector.broadcast %5 : f32 to vector<64x128xf32>
    %7 = arith.mulf %0, %6 : vector<64x128xf32>
    %c0_2 = arith.constant 0 : index
    %c0_3 = arith.constant 0 : index
    %8 = vector.load %arg1[%c0_2, %c0_3] : memref<64x128xf32, #tpu.memory_space<vmem>>, vector<64x128xf32>
    tpu.vector_store %arg1[%c0_2, %c0_3], %7 {strides = array<i32>} : memref<64x128xf32, #tpu.memory_space<vmem>>, vector<64x128xf32>,
    return
  }
}

</mosaic_0001>

<llo_original>
// kernel: tpu_custom_call.1
$region0: #{tpu_custom_call.1}
  #allocation0 [shape = 'u32[]', space=smem, size = 0x4, offset = 0x4, fixed_abs, tag = 'smem constant byte address 0x4 - core index']
  #allocation1 [shape = 'u32[144,128]{1,0:T(1,128)}', space=vmem, size = 0x12000, scoped, tag = 'internal scratch']
  %s0 = inlined_call_operand.hbm [shape: f32[64,128], index: 0, kind: input, shape index: {}, may-alias: {0,1}]
  %s1 = inlined_call_operand.hbm [shape: f32[64,128], index: 1, kind: output, shape index: {}, may-alias: {0,1}]
  %s2 = sld [smem:[#allocation0]]
  $region18: #{tpu_custom_call.1} parent=0
    _
  %s4 = ssub.s32 1, %s2
  %s5 = scalar_select 0, %s4, %s2
  $region1: #{tpu_custom_call.1} parent=0
    #allocation2 [shape = 'u8[32768]{0}', space=vmem, size = 0x8000, scoped, tag = 'input window, operand 0, single buffered']
    #allocation3 [shape = 's32[1]{0}', space=sflag, size = 0x4, scoped, tag = 'scoped memory for tpu_custom_call.1']
    #allocation4 [shape = 's32[1]{0}', space=sflag, size = 0x4, scoped, tag = 'scoped memory for tpu_custom_call.1']
    #allocation5 [shape = 'u8[32768]{0}', space=vmem, size = 0x8000, scoped, tag = 'output window, operand 0, single buffered']
    %6 = vsyncpa [#allocation3], 0
    %7 = vsyncpa [#allocation4], 0
    // Predicated region
    $region2: #{tpu_custom_call.1} parent=1 // pred_check
      _
    $region3: #{tpu_custom_call.1} parent=1 // pred_check_branch
      %9 = sbr.rel (0) target = $region5
    $region4: #{tpu_custom_call.1} parent=1 // pred_region
      %s11 = ssub.s32 1024, 1024
      %12 = vsyncadd [#allocation3], %s11
      %s13 = sshll.u32 [#allocation2], 4
      %s14 = int_to_ptr.vmem [resolvable:$true] %s13
      %19 = dma.hbm_to_vmem [thread:$0]  %s0, 1024, %s14, [#allocation3], 128, 128, 8
    $region5: #{tpu_custom_call.1} parent=1 // pred_fallthru
      _
    // Predicated region
    $region6: #{tpu_custom_call.1} parent=1 // pred_check
      _
    $region7: #{tpu_custom_call.1} parent=1 // pred_check_branch
      %21 = sbr.rel (0) target = $region9
    $region8: #{tpu_custom_call.1} parent=1 // pred_region
      %22 = dma.done [#allocation3], 1024
    $region9: #{tpu_custom_call.1} parent=1 // pred_fallthru
      _
    %v23 = vld [vmem:[#allocation2] sm:$0xff]
    %v24 = vld [vmem:[#allocation2 + $0x8] sm:$0xff]
    %v25 = vld [vmem:[#allocation2 + $0x10] sm:$0xff]
    %v26 = vld [vmem:[#allocation2 + $0x18] sm:$0xff]
    %v27 = vld [vmem:[#allocation2 + $0x20] sm:$0xff]
    %v28 = vld [vmem:[#allocation2 + $0x28] sm:$0xff]
    %v29 = vld [vmem:[#allocation2 + $0x30] sm:$0xff]
    %v30 = vld [vmem:[#allocation2 + $0x38] sm:$0xff]
    %v31 = vadd.f32 %v23, %v24
    %v32 = vadd.f32 %v31, %v25
    %v33 = vadd.f32 %v32, %v26
    %v34 = vadd.f32 %v33, %v27
    %v35 = vadd.f32 %v34, %v28
    %v36 = vadd.f32 %v35, %v29
    %v37 = vadd.f32 %v36, %v30
    %38 = vadd.xlane.f32.xlu0 %v37
    %v39 = vpop.xlane.xlu0 %38
    %v40 = vrot.slane %v39, 4
    %v41 = vadd.f32 %v39, %v40
    %v42 = vrot.slane %v41, 2
    %v43 = vadd.f32 %v41, %v42
    %v44 = vrot.slane %v43, 1
    %v45 = vadd.f32 %v43, %v44
    %s46 = vtos %v45
    %v47 = vstv %s46
    %v48 = vrcp.pop %v47
    %s49 = vtos %v48
    %v50 = vstv %s49
    %v51 = vmul.f32 %v23, %v50
    %v52 = vmul.f32 %v24, %v50
    %v53 = vmul.f32 %v25, %v50
    %v54 = vmul.f32 %v26, %v50
    %v55 = vmul.f32 %v27, %v50
    %v56 = vmul.f32 %v28, %v50
    %v57 = vmul.f32 %v29, %v50
    %v58 = vmul.f32 %v30, %v50
    %59 = vst [vmem:[#allocation5] sm:$0xff] %v51
    %60 = vst [vmem:[#allocation5 + $0x8] sm:$0xff] %v52
    %61 = vst [vmem:[#allocation5 + $0x10] sm:$0xff] %v53
    %62 = vst [vmem:[#allocation5 + $0x18] sm:$0xff] %v54
    %63 = vst [vmem:[#allocation5 + $0x20] sm:$0xff] %v55
    %64 = vst [vmem:[#allocation5 + $0x28] sm:$0xff] %v56
    %65 = vst [vmem:[#allocation5 + $0x30] sm:$0xff] %v57
    %66 = vst [vmem:[#allocation5 + $0x38] sm:$0xff] %v58
    // Predicated region
    $region10: #{tpu_custom_call.1} parent=1 // pred_check
      _
    $region11: #{tpu_custom_call.1} parent=1 // pred_check_branch
      %68 = sbr.rel (0) target = $region13
    $region12: #{tpu_custom_call.1} parent=1 // pred_region
      %s70 = ssub.s32 1024, 1024
      %71 = vsyncadd [#allocation4], %s70
      %s72 = sshll.u32 [#allocation5], 4
      %s73 = int_to_ptr.vmem [resolvable:$true] %s72
      %78 = dma.vmem_to_hbm [thread:$0]  %s73, 1024, %s1, [#allocation4], 128, 128, 8
    $region13: #{tpu_custom_call.1} parent=1 // pred_fallthru
      _
    // Predicated region
    $region14: #{tpu_custom_call.1} parent=1 // pred_check
      _
    $region15: #{tpu_custom_call.1} parent=1 // pred_check_branch
      %80 = sbr.rel (0) target = $region17
    $region16: #{tpu_custom_call.1} parent=1 // pred_region
      %81 = dma.done [#allocation4], 1024
    $region17: #{tpu_custom_call.1} parent=1 // pred_fallthru
      _
    %82 = vsyncpa [#allocation3], 1
    %83 = vsyncpa [#allocation4], 1

</llo_original>
